<compile_context>
chip_gen: v7x
topology: tpu7x:2x2x1
jax: 0.10.0
libtpu: 0.0.40
codegen_flags: <defaults>
</compile_context>

<pallas_src>
import functools

import jax
import jax.numpy as jnp
from jax import lax
from jax.experimental import pallas as pl
from jax.experimental.pallas import tpu as pltpu

LANES = 128
SUBLANES = 8
TARGET_BLOCK_BYTES = 2 * 1024 * 1024   # ~2 MiB of input per block per step
VMEM_LIMIT_BYTES = 32 * 1024 * 1024    # explicit scoped-VMEM budget (safe on all chips)


def _num_tensorcores():
    """2 on dual-TensorCore chips (v7x), else 1 (the always-correct default)."""
    try:
        kind = jax.devices()[0].device_kind.lower()
    except Exception:
        return 1
    return 2 if ("v7" in kind or "tpu7" in kind) else 1


def _sdl_kernel(x_ref, y_ref, o_ref, *, row_tile, blocks_per_core, blocks,
                rows_last, has_partial, has_phantom):
    # o_ref: (8, 128) f32 accumulator.  Its block index only depends on the
    # parallel (core) axis, so it stays resident in VMEM across the
    # "arbitrary" reduction axis.
    @pl.when(pl.program_id(1) == 0)
    def _():
        o_ref[...] = jnp.zeros_like(o_ref)

    block_id = pl.program_id(0) * blocks_per_core + pl.program_id(1)

    def compute():
        x = x_ref[...].astype(jnp.float32)
        y = y_ref[...].astype(jnp.float32)
        val = jnp.exp(-jnp.abs(x - y))           # exp runs on the EUP (own slot)

        def accumulate(v):
            # Fold (row_tile, 128) -> (8, 128): pure elementwise VPU adds
            # across vregs; no per-step cross-lane (XLU) reduction.
            o_ref[...] += v.reshape(row_tile // SUBLANES, SUBLANES, LANES
                                    ).sum(axis=0)

        if has_partial:
            # Only the single boundary block pays for the row mask; every
            # other step takes the unmasked fast path.
            is_last = block_id == blocks - 1

            @pl.when(jnp.logical_not(is_last))
            def _():
                accumulate(val)

            @pl.when(is_last)
            def _():
                row_iota = lax.broadcasted_iota(jnp.int32, (row_tile, LANES), 0)
                accumulate(jnp.where(row_iota < rows_last, val, 0.0))
        else:
            accumulate(val)

    if has_phantom:
        # Odd block split across cores: the clamped phantom step does no work.
        pl.when(block_id < blocks)(compute)
    else:
        compute()


def signal_difference_loss(x, y):
    """Replicates SignalDifferenceLoss.forward for JAX arrays (or None)."""
    if x is None or y is None:
        # Matches the PyTorch early return (later None branches unreachable).
        return jnp.array(jnp.inf, dtype=jnp.float32)

    xf = jnp.ravel(x)                    # keep native dtype (cast in-kernel)
    yf = jnp.ravel(y)
    n = xf.shape[0]
    if n == 0:
        return jnp.float32(0.0)

    itemsize = max(xf.dtype.itemsize, yf.dtype.itemsize)
    # Native min-tile rows: 8 for f32, 16 for bf16, 32 for int8/fp8.
    row_align = SUBLANES * max(1, 4 // itemsize)

    n_main = (n // LANES) * LANES        # lane-aligned prefix
    rows = n_main // LANES
    if rows < row_align:
        # Tiny input: a kernel launch is not worth it.
        return jnp.sum(jnp.exp(-jnp.abs(xf.astype(jnp.float32)
                                        - yf.astype(jnp.float32))))

    tail_loss = jnp.float32(0.0)
    if n_main != n:
        # Ragged (<128 element) tail summed with plain jnp; the main body is
        # the lane-aligned prefix.  (The prefix slice may still copy; this is
        # only hit when the element count is not a multiple of 128.)
        tail_loss = jnp.sum(jnp.exp(-jnp.abs(
            xf[n_main:].astype(jnp.float32) - yf[n_main:].astype(jnp.float32))))
        xf = xf[:n_main]
        yf = yf[:n_main]

    x2 = xf.reshape(rows, LANES)         # zero-copy (row-major bitcast)
    y2 = yf.reshape(rows, LANES)

    # dtype-aware block size: ~2 MiB of input per step, aligned to the native
    # sublane tile, never larger than the array (last block may overhang).
    target_rows = TARGET_BLOCK_BYTES // (LANES * itemsize)
    row_tile = min(target_rows, (rows // row_align) * row_align)
    blocks = -(-rows // row_tile)
    has_partial = blocks * row_tile != rows
    rows_last = rows - (blocks - 1) * row_tile    # valid rows in last block

    # Use the second TensorCore only where it exists AND there is real work
    # for it; otherwise a flat single-core grid (no duplicated masked pass).
    ncores = _num_tensorcores() if blocks >= 2 else 1
    blocks_per_core = -(-blocks // ncores)
    has_phantom = ncores * blocks_per_core != blocks

    if has_phantom:
        def in_map(c, i):
            # Clamp phantom steps to the last real block (their compute is
            # skipped in-kernel).
            return (jnp.minimum(c * blocks_per_core + i, blocks - 1), 0)
    else:
        def in_map(c, i):
            return (c * blocks_per_core + i, 0)

    kernel = functools.partial(
        _sdl_kernel,
        row_tile=row_tile,
        blocks_per_core=blocks_per_core,
        blocks=blocks,
        rows_last=rows_last,
        has_partial=has_partial,
        has_phantom=has_phantom,
    )

    partials = pl.pallas_call(
        kernel,
        out_shape=jax.ShapeDtypeStruct((ncores, SUBLANES, LANES), jnp.float32),
        grid_spec=pltpu.PrefetchScalarGridSpec(
            num_scalar_prefetch=0,
            grid=(ncores, blocks_per_core),
            in_specs=[
                pl.BlockSpec((row_tile, LANES), in_map),
                pl.BlockSpec((row_tile, LANES), in_map),
            ],
            out_specs=pl.BlockSpec((None, SUBLANES, LANES),
                                   lambda c, i: (c, 0, 0)),
        ),
        compiler_params=pltpu.CompilerParams(
            dimension_semantics=("parallel", "arbitrary"),
            vmem_limit_bytes=VMEM_LIMIT_BYTES,
        ),
        cost_estimate=pl.CostEstimate(
            flops=3 * n_main,
            transcendentals=n_main,
            bytes_accessed=n_main * (x2.dtype.itemsize + y2.dtype.itemsize)
                           + ncores * SUBLANES * LANES * 4,
        ),
    )(x2, y2)

    # Single final cross-lane reduction over the (ncores, 8, 128) partials.
    return jnp.sum(partials) + tail_loss


if __name__ == "__main__":
    key = jax.random.PRNGKey(0)
    kx, ky, ka, kb = jax.random.split(key, 4)

    # None early-return branch (matches the PyTorch module).
    assert bool(jnp.isinf(signal_difference_loss(None, None)))

    # NCHW, lane-aligned case: zero-copy reshape, unmasked fast path only.
    x = jax.random.normal(kx, (2, 4, 16, 16), dtype=jnp.float32)
    y = jax.random.normal(ky, (2, 4, 16, 16), dtype=jnp.float32)
    loss = signal_difference_loss(x, y)
    jax.block_until_ready(loss)
    ref = jnp.sum(jnp.exp(-jnp.abs(x - y)))
    assert jnp.allclose(loss, ref, rtol=1e-5, atol=1e-5), (loss, ref)

    # Ragged case: exercises the row-masked boundary block + <128-elem tail.
    a = jax.random.normal(ka, (3, 5, 7, 11), dtype=jnp.float32)
    b = jax.random.normal(kb, (3, 5, 7, 11), dtype=jnp.float32)
    loss2 = signal_difference_loss(a, b)
    jax.block_until_ready(loss2)
    ref2 = jnp.sum(jnp.exp(-jnp.abs(a - b)))
    assert jnp.allclose(loss2, ref2, rtol=1e-5, atol=1e-5), (loss2, ref2)

    print("KERNEL_OK")
</pallas_src>

<mosaic_0001>
module attributes {stable_mosaic.version = 11 : i64} {
  func.func @_sdl_kernel(%arg0: i32, %arg1: i32, %arg2: memref<16x128xf32, #tpu.memory_space<vmem>>, %arg3: memref<16x128xf32, #tpu.memory_space<vmem>>, %arg4: memref<1x8x128xf32, #tpu.memory_space<vmem>>) attributes {dimension_semantics = [#tpu.dimension_semantics<parallel>, #tpu.dimension_semantics<arbitrary>], iteration_bounds = array<i64: 1, 1>, scalar_prefetch = 0 : i64, scratch_operands = 0 : i64, tpu.core_type = #tpu.core_type<tc>, window_params = [{transform_indices = @transform_0, window_bounds = array<i64: 16, 128>}, {transform_indices = @transform_1, window_bounds = array<i64: 16, 128>}, {transform_indices = @transform_2, window_bounds = array<i64: 1, 8, 128>}]} {
    %c0_i32 = arith.constant 0 : i32
    %0 = arith.cmpi eq, %arg1, %c0_i32 : i32
    %1 = arith.extui %0 : i1 to i32
    %c0_i32_0 = arith.constant 0 : i32
    %2 = arith.cmpi ne, %1, %c0_i32_0 : i32
    scf.if %2 {
      %cst_11 = arith.constant 0.000000e+00 : f32
      %18 = vector.broadcast %cst_11 : f32 to vector<8x128xf32>
      %c0_12 = arith.constant 0 : index
      %c0_13 = arith.constant 0 : index
      %c0_14 = arith.constant 0 : index
      %19 = vector.load %arg4[%c0_12, %c0_13, %c0_14] : memref<1x8x128xf32, #tpu.memory_space<vmem>>, vector<1x8x128xf32>
      %20 = vector.shape_cast %19 : vector<1x8x128xf32> to vector<8x128xf32>
      %21 = vector.shape_cast %18 : vector<8x128xf32> to vector<1x8x128xf32>
      tpu.vector_store %arg4[%c0_12, %c0_13, %c0_14], %21 {strides = array<i32>} : memref<1x8x128xf32, #tpu.memory_space<vmem>>, vector<1x8x128xf32>,
    } else {
    }
    %c0 = arith.constant 0 : index
    %c0_1 = arith.constant 0 : index
    %3 = vector.load %arg2[%c0, %c0_1] : memref<16x128xf32, #tpu.memory_space<vmem>>, vector<16x128xf32>
    %c0_2 = arith.constant 0 : index
    %c0_3 = arith.constant 0 : index
    %4 = vector.load %arg3[%c0_2, %c0_3] : memref<16x128xf32, #tpu.memory_space<vmem>>, vector<16x128xf32>
    %5 = arith.subf %3, %4 : vector<16x128xf32>
    %6 = math.absf %5 : vector<16x128xf32>
    %cst = arith.constant 0.000000e+00 : f32
    %7 = vector.broadcast %cst : f32 to vector<16x128xf32>
    %8 = arith.subf %7, %6 : vector<16x128xf32>
    %9 = math.exp %8 : vector<16x128xf32>
    %c0_4 = arith.constant 0 : index
    %c0_5 = arith.constant 0 : index
    %c0_6 = arith.constant 0 : index
    %10 = vector.load %arg4[%c0_4, %c0_5, %c0_6] : memref<1x8x128xf32, #tpu.memory_space<vmem>>, vector<1x8x128xf32>
    %11 = vector.shape_cast %10 : vector<1x8x128xf32> to vector<8x128xf32>
    %12 = vector.shape_cast %9 : vector<16x128xf32> to vector<2x8x128xf32>
    %cst_7 = arith.constant dense<0.000000e+00> : vector<8x128xf32>
    %13 = vector.multi_reduction <add>, %12, %cst_7 [0] : vector<2x8x128xf32> to vector<8x128xf32>
    %14 = arith.addf %11, %13 : vector<8x128xf32>
    %c0_8 = arith.constant 0 : index
    %c0_9 = arith.constant 0 : index
    %c0_10 = arith.constant 0 : index
    %15 = vector.load %arg4[%c0_8, %c0_9, %c0_10] : memref<1x8x128xf32, #tpu.memory_space<vmem>>, vector<1x8x128xf32>
    %16 = vector.shape_cast %15 : vector<1x8x128xf32> to vector<8x128xf32>
    %17 = vector.shape_cast %14 : vector<8x128xf32> to vector<1x8x128xf32>
    tpu.vector_store %arg4[%c0_8, %c0_9, %c0_10], %17 {strides = array<i32>} : memref<1x8x128xf32, #tpu.memory_space<vmem>>, vector<1x8x128xf32>,
    return
  }
  func.func @transform_0(%arg0: i32, %arg1: i32) -> (i32, i32) {
    %c1_i32 = arith.constant 1 : i32
    %0 = arith.muli %arg0, %c1_i32 : i32
    %1 = arith.addi %0, %arg1 : i32
    %c0_i32 = arith.constant 0 : i32
    %c0_i32_0 = arith.constant 0 : i32
    return %1, %c0_i32 : i32, i32
  }
  func.func @transform_1(%arg0: i32, %arg1: i32) -> (i32, i32) {
    %c1_i32 = arith.constant 1 : i32
    %0 = arith.muli %arg0, %c1_i32 : i32
    %1 = arith.addi %0, %arg1 : i32
    %c0_i32 = arith.constant 0 : i32
    %c0_i32_0 = arith.constant 0 : i32
    return %1, %c0_i32 : i32, i32
  }
  func.func @transform_2(%arg0: i32, %arg1: i32) -> (i32, i32, i32) {
    %c0_i32 = arith.constant 0 : i32
    %c0_i32_0 = arith.constant 0 : i32
    %c0_i32_1 = arith.constant 0 : i32
    return %arg0, %c0_i32, %c0_i32_0 : i32, i32, i32
  }
}

</mosaic_0001>

<llo_original>
// kernel: tpu_custom_call.1
$region0: #{tpu_custom_call.1}
  #allocation0 [shape = 'u32[]', space=smem, size = 0x4, offset = 0x4, fixed_abs, tag = 'smem constant byte address 0x4 - core index']
  #allocation1 [shape = 'u32[144,128]{1,0:T(1,128)}', space=vmem, size = 0x12000, scoped, tag = 'internal scratch']
  %s0 = inlined_call_operand.hbm [shape: f32[16,128], index: 0, kind: input, shape index: {}]
  %s1 = inlined_call_operand.hbm [shape: f32[16,128], index: 1, kind: input, shape index: {}]
  %s2 = inlined_call_operand.hbm [shape: f32[1,8,128], index: 2, kind: output, shape index: {}]
  %s3 = sld [smem:[#allocation0]]
  $region30: #{tpu_custom_call.1} parent=0
    _
  %s5 = ssub.s32 1, %s3
  %s6 = scalar_select 0, %s5, %s3
  $region1: #{tpu_custom_call.1} parent=0
    #allocation2 [shape = 'u8[8192]{0}', space=vmem, size = 0x2000, scoped, tag = 'input window, operand 0, single buffered']
    #allocation3 [shape = 's32[1]{0}', space=sflag, size = 0x4, scoped, tag = 'scoped memory for tpu_custom_call.1']
    #allocation4 [shape = 's32[1]{0}', space=sflag, size = 0x4, scoped, tag = 'scoped memory for tpu_custom_call.1']
    #allocation5 [shape = 'u8[8192]{0}', space=vmem, size = 0x2000, scoped, tag = 'input window, operand 1, single buffered']
    #allocation6 [shape = 's32[1]{0}', space=sflag, size = 0x4, scoped, tag = 'scoped memory for tpu_custom_call.1']
    #allocation7 [shape = 'u8[4096]{0}', space=vmem, size = 0x1000, scoped, tag = 'output window, operand 0, single buffered']
    %7 = vsyncpa [#allocation3], 0
    %8 = vsyncpa [#allocation6], 0
    %9 = vsyncpa [#allocation4], 0
    // Predicated region
    $region2: #{tpu_custom_call.1} parent=1 // pred_check
      _
    $region3: #{tpu_custom_call.1} parent=1 // pred_check_branch
      %11 = sbr.rel (0) target = $region5
    $region4: #{tpu_custom_call.1} parent=1 // pred_region
      %s12 = sadd.s32 0, 0
      %s13 = smul.u32 2, %s12
      %s15 = ssub.s32 256, 256
      %16 = vsyncadd [#allocation3], %s15
      %s17 = smul.addr %s13, 128
      %s18 = scalar_lea.hbm %s0, %s17
      %s19 = sshll.u32 [#allocation2], 4
      %s20 = int_to_ptr.vmem [resolvable:$true] %s19
      %25 = dma.hbm_to_vmem [thread:$0]  %s18, 256, %s20, [#allocation3], 128, 128, 8
    $region5: #{tpu_custom_call.1} parent=1 // pred_fallthru
      _
    // Predicated region
    $region6: #{tpu_custom_call.1} parent=1 // pred_check
      _
    $region7: #{tpu_custom_call.1} parent=1 // pred_check_branch
      %27 = sbr.rel (0) target = $region9
    $region8: #{tpu_custom_call.1} parent=1 // pred_region
      %s28 = sadd.s32 0, 0
      %s29 = smul.u32 2, %s28
      %s31 = ssub.s32 256, 256
      %32 = vsyncadd [#allocation6], %s31
      %s33 = smul.addr %s29, 128
      %s34 = scalar_lea.hbm %s1, %s33
      %s35 = sshll.u32 [#allocation5], 4
      %s36 = int_to_ptr.vmem [resolvable:$true] %s35
      %41 = dma.hbm_to_vmem [thread:$0]  %s34, 256, %s36, [#allocation6], 128, 128, 8
    $region9: #{tpu_custom_call.1} parent=1 // pred_fallthru
      _
    // Predicated region
    $region10: #{tpu_custom_call.1} parent=1 // pred_check
      _
    $region11: #{tpu_custom_call.1} parent=1 // pred_check_branch
      %43 = sbr.rel (0) target = $region13
    $region12: #{tpu_custom_call.1} parent=1 // pred_region
      %44 = dma.done [#allocation3], 256
    $region13: #{tpu_custom_call.1} parent=1 // pred_fallthru
      _
    // Predicated region
    $region14: #{tpu_custom_call.1} parent=1 // pred_check
      _
    $region15: #{tpu_custom_call.1} parent=1 // pred_check_branch
      %46 = sbr.rel (0) target = $region17
    $region16: #{tpu_custom_call.1} parent=1 // pred_region
      %47 = dma.done [#allocation6], 256
    $region17: #{tpu_custom_call.1} parent=1 // pred_fallthru
      _
    %s48 = sadd.s32 0, 0
    %s49 = smul.u32 2, %s48
    %s50 = sadd.s32 0, 0
    %s51 = smul.u32 2, %s50
    %p52 = scmp.eq.s32.totalorder 0, 0
    // Predicated region
    $region18: #{tpu_custom_call.1} parent=1 // pred_check
      %p53 = pneg %p52
    $region19: #{tpu_custom_call.1} parent=1 // pred_check_branch
      %55 = sbr.rel (%p53) target = $region21
    $region20: #{tpu_custom_call.1} parent=1 // pred_region
      %56 = vst [vmem:[#allocation7] sm:$0xff] 0.0
    $region21: #{tpu_custom_call.1} parent=1 // pred_fallthru
      _
    %v57 = vld [vmem:[#allocation2] sm:$0xff]
    %v58 = vld [vmem:[#allocation2 + $0x8] sm:$0xff]
    %v59 = vld [vmem:[#allocation5] sm:$0xff]
    %v60 = vld [vmem:[#allocation5 + $0x8] sm:$0xff]
    %v61 = vsub.f32 %v57, %v59
    %v62 = vsub.f32 %v58, %v60
    %v63 = vand.u32 2147483647, %v61
    %v64 = vand.u32 2147483647, %v62
    %v65 = vsub.f32 0.0, %v63
    %v66 = vsub.f32 0.0, %v64
    %v67 = vmul.f32 %v65, 1.442695
    %v68 = vpow.pop %v67
    %v69 = vmul.f32 %v66, 1.442695
    %v70 = vpow.pop %v69
    %v71 = vld [vmem:[#allocation7] sm:$0xff]
    %v72 = vadd.f32 %v68, %v70
    %v73 = vadd.f32 %v71, %v72
    %74 = vst [vmem:[#allocation7] sm:$0xff] %v73
    // Predicated region
    $region22: #{tpu_custom_call.1} parent=1 // pred_check
      _
    $region23: #{tpu_custom_call.1} parent=1 // pred_check_branch
      %76 = sbr.rel (0) target = $region25
    $region24: #{tpu_custom_call.1} parent=1 // pred_region
      %s78 = ssub.s32 128, 128
      %79 = vsyncadd [#allocation4], %s78
      %s81 = sshll.u32 [#allocation7], 4
      %s82 = int_to_ptr.vmem [resolvable:$true] %s81
      %84 = dma.vmem_to_hbm [thread:$0]  %s82, 128, %s2, [#allocation4]
    $region25: #{tpu_custom_call.1} parent=1 // pred_fallthru
      _
    // Predicated region
    $region26: #{tpu_custom_call.1} parent=1 // pred_check
      _
    $region27: #{tpu_custom_call.1} parent=1 // pred_check_branch
      %86 = sbr.rel (0) target = $region29
    $region28: #{tpu_custom_call.1} parent=1 // pred_region
      %87 = dma.done [#allocation4], 128
    $region29: #{tpu_custom_call.1} parent=1 // pred_fallthru
      _
    %88 = vsyncpa [#allocation3], 1
    %89 = vsyncpa [#allocation6], 1
    %90 = vsyncpa [#allocation4], 1

</llo_original>
